<compile_context>
chip_gen: v7x
topology: tpu7x:2x2x1
jax: 0.10.0
libtpu: 0.0.40
codegen_flags: <defaults>
</compile_context>

<pallas_src>
import functools

import numpy as np
import jax
import jax.numpy as jnp
from jax.experimental import pallas as pl
from jax.experimental.pallas import tpu as pltpu


# ---------------------------------------------------------------------------
# Kernel: one SAGE 'mean' layer  out = H @ W_self + (A_norm @ H) @ W_neigh + b
# (optionally ReLU'd), with W_self/W_neigh pre-stacked into one [2F, G] weight.
# Grid = (row tiles, K tiles); K is the reduction over A's columns / H's rows.
# ---------------------------------------------------------------------------
def _sage_layer_kernel(a_ref, hk_ref, hi_ref, w_ref, b_ref, o_ref,
                       acc_ref, z_ref, *, apply_relu):
    k = pl.program_id(1)

    @pl.when(k == 0)
    def _():
        acc_ref[...] = jnp.zeros_like(acc_ref)

    # Neighbor-mean accumulation: acc += A[i-tile, k-tile] @ H[k-tile]  (bf16 x bf16 -> f32)
    acc_ref[...] += jnp.dot(a_ref[...], hk_ref[...],
                            preferred_element_type=jnp.float32)

    @pl.when(k == pl.num_programs(1) - 1)
    def _():
        f = hi_ref.shape[1]
        # Assemble Z = [H_self | agg] in a bf16 scratch -> single K=2F MXU contraction.
        z_ref[:, :f] = hi_ref[...]
        z_ref[:, f:] = acc_ref[...].astype(z_ref.dtype)
        out = jnp.dot(z_ref[...], w_ref[...],
                      preferred_element_type=jnp.float32) + b_ref[...]
        if apply_relu:
            out = jnp.maximum(out, 0.0)
        o_ref[...] = out.astype(o_ref.dtype)


def _sage_layer(adj, h, w_stacked, bias, *, apply_relu, out_dtype, tm, tk):
    """adj: [N, N] bf16 row-normalized adjacency (N multiple of tm and tk).
       h:   [N, F] bf16 node features (F multiple of 128).
       w_stacked: [2F, G] bf16 ([W_self; W_neigh]).  bias: [1, G] f32."""
    n = adj.shape[0]
    f = h.shape[1]
    g = w_stacked.shape[1]
    grid = (n // tm, n // tk)

    kernel = functools.partial(_sage_layer_kernel, apply_relu=apply_relu)

    flops = 2 * n * n * f + 2 * n * (2 * f) * g
    bytes_accessed = (n * n * 2                      # adjacency (bf16)
                      + (n // tm) * n * f * 2        # H k-tiles, re-read per row tile
                      + n * f * 2                    # H self rows (resident per row tile)
                      + 2 * f * g * 2                # stacked weights
                      + g * 4                        # bias
                      + n * g * jnp.dtype(out_dtype).itemsize)

    return pl.pallas_call(
        kernel,
        out_shape=jax.ShapeDtypeStruct((n, g), out_dtype),
        grid_spec=pltpu.PrefetchScalarGridSpec(
            num_scalar_prefetch=0,
            grid=grid,
            in_specs=[
                pl.BlockSpec((tm, tk), lambda i, k: (i, k)),    # A row/col tile
                pl.BlockSpec((tk, f), lambda i, k: (k, 0)),     # H rows for aggregation
                pl.BlockSpec((tm, f), lambda i, k: (i, 0)),     # H rows for self term
                pl.BlockSpec((2 * f, g), lambda i, k: (0, 0)),  # [W_self; W_neigh]
                pl.BlockSpec((1, g), lambda i, k: (0, 0)),      # bias
            ],
            out_specs=pl.BlockSpec((tm, g), lambda i, k: (i, 0)),
            scratch_shapes=[
                pltpu.VMEM((tm, f), jnp.float32),      # f32 aggregation accumulator
                pltpu.VMEM((tm, 2 * f), jnp.bfloat16)  # fused [H | agg] operand
            ]),
        compiler_params=pltpu.CompilerParams(
            dimension_semantics=("parallel", "arbitrary"),
            vmem_limit_bytes=48 * 1024 * 1024),
        cost_estimate=pl.CostEstimate(flops=flops, transcendentals=0,
                                      bytes_accessed=int(bytes_accessed)),
    )(adj, h, h, w_stacked, bias)


# ---------------------------------------------------------------------------
# Host-side packing + full forward pass
# ---------------------------------------------------------------------------
def _round_up(v, m):
    return ((v + m - 1) // m) * m


def _pad2(m, rows, cols):
    m = jnp.asarray(m, jnp.float32)
    r, c = m.shape
    return jnp.pad(m, ((0, rows - r), (0, cols - c)))


def _pick_tiles(n_pad):
    """tm stays 128 (>=2 row tiles for megacore when N>=256); tk grows to cut
    per-step overhead while keeping n_pad % tk == 0 (n_pad is a 128-multiple)."""
    tm = min(128, n_pad)
    tk = tm
    for cand in (512, 256):
        if n_pad % cand == 0:
            tk = cand
            break
    return tm, tk


def node_recommendation_forward(adj_norm, x, params):
    """adj_norm: [N, N] f32 row-normalized adjacency; x: [N, in_feats] f32."""
    n, in_feats = x.shape
    h_feats = params["w_self1"].shape[1]

    fp = _round_up(max(in_feats, 1), 128)   # lane-dense padded feature widths
    hp = _round_up(max(h_feats, 1), 128)
    n_pad = _round_up(n, 128)
    tm, tk = _pick_tiles(n_pad)

    # Pad to tile multiples, cast the big operands to bf16.
    adj_p = _pad2(adj_norm, n_pad, n_pad).astype(jnp.bfloat16)
    x_p = _pad2(x, n_pad, fp).astype(jnp.bfloat16)

    # Layer 1: stacked [W_self; W_neigh], zero-padded to 128 multiples.
    w1 = jnp.concatenate([_pad2(params["w_self1"], fp, hp),
                          _pad2(params["w_neigh1"], fp, hp)], axis=0).astype(jnp.bfloat16)
    b1 = _pad2(params["b1"], 1, hp)

    # Layer 2 with the final Linear folded in (no nonlinearity in between):
    #   out = h1 @ (Ws2 @ Wfc) + agg2 @ (Wn2 @ Wfc) + (b2 @ Wfc + b_fc)
    w_self2f = params["w_self2"] @ params["w_fc"]
    w_neigh2f = params["w_neigh2"] @ params["w_fc"]
    b2f = params["b2"] @ params["w_fc"] + params["b_fc"]
    w2 = jnp.concatenate([_pad2(w_self2f, hp, fp),
                          _pad2(w_neigh2f, hp, fp)], axis=0).astype(jnp.bfloat16)
    b2 = _pad2(b2f, 1, fp)

    h1 = _sage_layer(adj_p, x_p, w1, b1, apply_relu=True,
                     out_dtype=jnp.bfloat16, tm=tm, tk=tk)
    out = _sage_layer(adj_p, h1, w2, b2, apply_relu=False,
                      out_dtype=jnp.float32, tm=tm, tk=tk)
    return out[:n, :in_feats]


# ---------------------------------------------------------------------------
# Parameter init, graph helper, pure-JAX reference
# ---------------------------------------------------------------------------
def init_params(key, in_feats, h_feats):
    ks = jax.random.split(key, 6)
    scale1 = 1.0 / np.sqrt(in_feats)
    scale2 = 1.0 / np.sqrt(h_feats)
    return {
        # SAGEConv1 (fc_self / fc_neigh weights stored as [in, out]; shared bias)
        "w_self1": jax.random.uniform(ks[0], (in_feats, h_feats), jnp.float32, -scale1, scale1),
        "w_neigh1": jax.random.uniform(ks[1], (in_feats, h_feats), jnp.float32, -scale1, scale1),
        "b1": jnp.zeros((1, h_feats), jnp.float32),
        # SAGEConv2
        "w_self2": jax.random.uniform(ks[2], (h_feats, h_feats), jnp.float32, -scale2, scale2),
        "w_neigh2": jax.random.uniform(ks[3], (h_feats, h_feats), jnp.float32, -scale2, scale2),
        "b2": jnp.zeros((1, h_feats), jnp.float32),
        # fc: Linear(h_feats, in_feats), stored transposed as [h_feats, in_feats]
        "w_fc": jax.random.uniform(ks[4], (h_feats, in_feats), jnp.float32, -scale2, scale2),
        "b_fc": jax.random.uniform(ks[5], (1, in_feats), jnp.float32, -scale2, scale2),
    }


def build_norm_adjacency(src, dst, num_nodes):
    """Dense row-normalized adjacency for 'mean' aggregation: A[d, s] = 1/in_deg(d)."""
    A = np.zeros((num_nodes, num_nodes), dtype=np.float32)
    np.add.at(A, (np.asarray(dst), np.asarray(src)), 1.0)
    deg = A.sum(axis=1, keepdims=True)
    deg = np.where(deg > 0.0, deg, 1.0)   # isolated nodes -> zero aggregation (DGL mean -> 0)
    return jnp.asarray(A / deg)


def reference_forward(adj_norm, x, params):
    """Pure-JAX f32 reference (mathematical spec of the original module)."""
    agg1 = adj_norm @ x
    h1 = jnp.maximum(x @ params["w_self1"] + agg1 @ params["w_neigh1"] + params["b1"], 0.0)
    agg2 = adj_norm @ h1
    h2 = h1 @ params["w_self2"] + agg2 @ params["w_neigh2"] + params["b2"]
    return h2 @ params["w_fc"] + params["b_fc"]


if __name__ == "__main__":
    key = jax.random.PRNGKey(0)
    k_feat, k_param = jax.random.split(key)

    num_nodes = 256
    in_feats = 16
    h_feats = 32

    # Deterministic sparse graph: ring + skip edges over the first 254 nodes,
    # last 2 nodes isolated (exercises the zero-aggregation path).
    m = num_nodes - 2
    base = np.arange(m, dtype=np.int64)
    src = np.concatenate([base, base, (base * 5) % m])
    dst = np.concatenate([(base + 1) % m, (base + 7) % m, base])
    adj_norm = build_norm_adjacency(src, dst, num_nodes)

    x = jax.random.normal(k_feat, (num_nodes, in_feats), dtype=jnp.float32)
    params = init_params(k_param, in_feats, h_feats)

    out = node_recommendation_forward(adj_norm, x, params)
    out = jax.block_until_ready(out)

    ref = reference_forward(adj_norm, x, params)
    # Tolerance accounts for bf16 adjacency / activation casts in the kernel.
    np.testing.assert_allclose(np.asarray(out), np.asarray(ref), rtol=2e-2, atol=2e-2)

    assert out.shape == (num_nodes, in_feats)
    print("KERNEL_OK")
</pallas_src>

<mosaic_0001>
module attributes {stable_mosaic.version = 11 : i64} {
  func.func @_sage_layer_kernel(%arg0: i32, %arg1: i32, %arg2: memref<128x256xbf16, #tpu.memory_space<vmem>>, %arg3: memref<256x128xbf16, #tpu.memory_space<vmem>>, %arg4: memref<128x128xbf16, #tpu.memory_space<vmem>>, %arg5: memref<256x128xbf16, #tpu.memory_space<vmem>>, %arg6: memref<1x128xf32, #tpu.memory_space<vmem>>, %arg7: memref<128x128xbf16, #tpu.memory_space<vmem>>, %arg8: memref<128x128xf32, #tpu.memory_space<vmem>>, %arg9: memref<128x256xbf16, #tpu.memory_space<vmem>>) attributes {dimension_semantics = [#tpu.dimension_semantics<parallel>, #tpu.dimension_semantics<arbitrary>], iteration_bounds = array<i64: 2, 1>, scalar_prefetch = 0 : i64, scratch_operands = 2 : i64, tpu.core_type = #tpu.core_type<tc>, window_params = [{transform_indices = @transform_0, window_bounds = array<i64: 128, 256>}, {transform_indices = @transform_1, window_bounds = array<i64: 256, 128>}, {transform_indices = @transform_2, window_bounds = array<i64: 128, 128>}, {pipeline_mode = #tpu.pipeline_mode<synchronous>, transform_indices = @transform_3, window_bounds = array<i64: 256, 128>}, {pipeline_mode = #tpu.pipeline_mode<synchronous>, transform_indices = @transform_4, window_bounds = array<i64: 1, 128>}, {transform_indices = @transform_5, window_bounds = array<i64: 128, 128>}]} {
    %c0_i32 = arith.constant 0 : i32
    %0 = arith.cmpi eq, %arg1, %c0_i32 : i32
    %1 = arith.extui %0 : i1 to i32
    %c0_i32_0 = arith.constant 0 : i32
    %2 = arith.cmpi ne, %1, %c0_i32_0 : i32
    scf.if %2 {
      %cst_10 = arith.constant 0.000000e+00 : f32
      %12 = vector.broadcast %cst_10 : f32 to vector<128x128xf32>
      %c0_11 = arith.constant 0 : index
      %c0_12 = arith.constant 0 : index
      %13 = vector.load %arg8[%c0_11, %c0_12] : memref<128x128xf32, #tpu.memory_space<vmem>>, vector<128x128xf32>
      tpu.vector_store %arg8[%c0_11, %c0_12], %12 {strides = array<i32>} : memref<128x128xf32, #tpu.memory_space<vmem>>, vector<128x128xf32>,
    } else {
    }
    %c0 = arith.constant 0 : index
    %c0_1 = arith.constant 0 : index
    %3 = vector.load %arg8[%c0, %c0_1] : memref<128x128xf32, #tpu.memory_space<vmem>>, vector<128x128xf32>
    %c0_2 = arith.constant 0 : index
    %c0_3 = arith.constant 0 : index
    %4 = vector.load %arg2[%c0_2, %c0_3] : memref<128x256xbf16, #tpu.memory_space<vmem>>, vector<128x256xbf16>
    %c0_4 = arith.constant 0 : index
    %c0_5 = arith.constant 0 : index
    %5 = vector.load %arg3[%c0_4, %c0_5] : memref<256x128xbf16, #tpu.memory_space<vmem>>, vector<256x128xbf16>
    %cst = arith.constant dense<0.000000e+00> : vector<128x128xf32>
    %6 = tpu.matmul %4, %5, %cst {dimension_numbers = #tpu.dot_dimension_numbers<[1], [0], [0], [1], [0, 0, 1, 1], [], []>} : vector<128x256xbf16>, vector<256x128xbf16>, vector<128x128xf32> -> vector<128x128xf32>
    %7 = arith.addf %3, %6 : vector<128x128xf32>
    %c0_6 = arith.constant 0 : index
    %c0_7 = arith.constant 0 : index
    %8 = vector.load %arg8[%c0_6, %c0_7] : memref<128x128xf32, #tpu.memory_space<vmem>>, vector<128x128xf32>
    tpu.vector_store %arg8[%c0_6, %c0_7], %7 {strides = array<i32>} : memref<128x128xf32, #tpu.memory_space<vmem>>, vector<128x128xf32>,
    %c0_i32_8 = arith.constant 0 : i32
    %9 = arith.cmpi eq, %arg1, %c0_i32_8 : i32
    %10 = arith.extui %9 : i1 to i32
    %c0_i32_9 = arith.constant 0 : i32
    %11 = arith.cmpi ne, %10, %c0_i32_9 : i32
    scf.if %11 {
      %c0_10 = arith.constant 0 : index
      %c0_11 = arith.constant 0 : index
      %12 = vector.load %arg4[%c0_10, %c0_11] : memref<128x128xbf16, #tpu.memory_space<vmem>>, vector<128x128xbf16>
      %c0_12 = arith.constant 0 : index
      %c0_13 = arith.constant 0 : index
      %13 = vector.load %arg9[%c0_12, %c0_13] : memref<128x256xbf16, #tpu.memory_space<vmem>>, vector<128x128xbf16>
      tpu.vector_store %arg9[%c0_12, %c0_13], %12 {strides = array<i32>} : memref<128x256xbf16, #tpu.memory_space<vmem>>, vector<128x128xbf16>,
      %c0_14 = arith.constant 0 : index
      %c0_15 = arith.constant 0 : index
      %14 = vector.load %arg8[%c0_14, %c0_15] : memref<128x128xf32, #tpu.memory_space<vmem>>, vector<128x128xf32>
      %15 = arith.truncf %14 : vector<128x128xf32> to vector<128x128xbf16>
      %c0_16 = arith.constant 0 : index
      %c128 = arith.constant 128 : index
      %16 = vector.load %arg9[%c0_16, %c128] : memref<128x256xbf16, #tpu.memory_space<vmem>>, vector<128x128xbf16>
      tpu.vector_store %arg9[%c0_16, %c128], %15 {strides = array<i32>} : memref<128x256xbf16, #tpu.memory_space<vmem>>, vector<128x128xbf16>,
      %c0_17 = arith.constant 0 : index
      %c0_18 = arith.constant 0 : index
      %17 = vector.load %arg9[%c0_17, %c0_18] : memref<128x256xbf16, #tpu.memory_space<vmem>>, vector<128x256xbf16>
      %c0_19 = arith.constant 0 : index
      %c0_20 = arith.constant 0 : index
      %18 = vector.load %arg5[%c0_19, %c0_20] : memref<256x128xbf16, #tpu.memory_space<vmem>>, vector<256x128xbf16>
      %cst_21 = arith.constant dense<0.000000e+00> : vector<128x128xf32>
      %19 = tpu.matmul %17, %18, %cst_21 {dimension_numbers = #tpu.dot_dimension_numbers<[1], [0], [0], [1], [0, 0, 1, 1], [], []>} : vector<128x256xbf16>, vector<256x128xbf16>, vector<128x128xf32> -> vector<128x128xf32>
      %c0_22 = arith.constant 0 : index
      %c0_23 = arith.constant 0 : index
      %20 = vector.load %arg6[%c0_22, %c0_23] : memref<1x128xf32, #tpu.memory_space<vmem>>, vector<1x128xf32>
      %21 = vector.broadcast %20 : vector<1x128xf32> to vector<128x128xf32>
      %22 = arith.addf %19, %21 : vector<128x128xf32>
      %cst_24 = arith.constant 0.000000e+00 : f32
      %23 = vector.broadcast %cst_24 : f32 to vector<128x128xf32>
      %24 = arith.maximumf %22, %23 : vector<128x128xf32>
      %25 = arith.truncf %24 : vector<128x128xf32> to vector<128x128xbf16>
      %c0_25 = arith.constant 0 : index
      %c0_26 = arith.constant 0 : index
      %26 = vector.load %arg7[%c0_25, %c0_26] : memref<128x128xbf16, #tpu.memory_space<vmem>>, vector<128x128xbf16>
      tpu.vector_store %arg7[%c0_25, %c0_26], %25 {strides = array<i32>} : memref<128x128xbf16, #tpu.memory_space<vmem>>, vector<128x128xbf16>,
    } else {
    }
    return
  }
  func.func @transform_0(%arg0: i32, %arg1: i32) -> (i32, i32) {
    %c0_i32 = arith.constant 0 : i32
    return %arg0, %arg1 : i32, i32
  }
  func.func @transform_1(%arg0: i32, %arg1: i32) -> (i32, i32) {
    %c0_i32 = arith.constant 0 : i32
    %c0_i32_0 = arith.constant 0 : i32
    return %arg1, %c0_i32 : i32, i32
  }
  func.func @transform_2(%arg0: i32, %arg1: i32) -> (i32, i32) {
    %c0_i32 = arith.constant 0 : i32
    %c0_i32_0 = arith.constant 0 : i32
    return %arg0, %c0_i32 : i32, i32
  }
  func.func @transform_3(%arg0: i32, %arg1: i32) -> (i32, i32) {
    %c0_i32 = arith.constant 0 : i32
    %c0_i32_0 = arith.constant 0 : i32
    %c0_i32_1 = arith.constant 0 : i32
    return %c0_i32, %c0_i32_0 : i32, i32
  }
  func.func @transform_4(%arg0: i32, %arg1: i32) -> (i32, i32) {
    %c0_i32 = arith.constant 0 : i32
    %c0_i32_0 = arith.constant 0 : i32
    %c0_i32_1 = arith.constant 0 : i32
    return %c0_i32, %c0_i32_0 : i32, i32
  }
  func.func @transform_5(%arg0: i32, %arg1: i32) -> (i32, i32) {
    %c0_i32 = arith.constant 0 : i32
    %c0_i32_0 = arith.constant 0 : i32
    return %arg0, %c0_i32 : i32, i32
  }
}

</mosaic_0001>

<llo_original>
// kernel: tpu_custom_call.1
$region0: #{tpu_custom_call.1}
  #allocation0 [shape = 'u32[]', space=smem, size = 0x4, offset = 0x4, fixed_abs, tag = 'smem constant byte address 0x4 - core index']
  #allocation1 [shape = 'u32[144,128]{1,0:T(1,128)}', space=vmem, size = 0x12000, scoped, tag = 'internal scratch']
  #allocation2 [shape = 'f32[128,128]{1,0:T(8,128)}', space=vmem, size = 0x10000, scoped, tag = 'scratch operand']
  #allocation3 [shape = 'bf16[128,256]{1,0:T(16,128)(2,1)}', space=vmem, size = 0x10000, scoped, tag = 'scratch operand']
  %s0 = inlined_call_operand.hbm [shape: bf16[256,256], index: 0, kind: input, shape index: {}]
  %s1 = inlined_call_operand.hbm [shape: bf16[256,128], index: 1, kind: input, shape index: {}]
  %s2 = inlined_call_operand.hbm [shape: bf16[256,128], index: 2, kind: input, shape index: {}]
  %s3 = inlined_call_operand.hbm [shape: bf16[256,128], index: 3, kind: input, shape index: {}]
  %s4 = inlined_call_operand.vmem [shape: f32[1,128], index: 4, kind: input, shape index: {}]
  %s5 = inlined_call_operand.hbm [shape: bf16[256,128], index: 5, kind: output, shape index: {}]
  %s6 = sld [smem:[#allocation0]]
  $region77: #{tpu_custom_call.1} parent=0
    _
  %s8 = ssub.s32 1, %s6
  %s9 = scalar_select 0, %s8, %s6
  $region1: #{tpu_custom_call.1} parent=0
    #allocation4 [shape = 'u8[131072]{0}', space=vmem, size = 0x20000, scoped, tag = 'input window, operand 0']
    #allocation5 [shape = 's32[2]{0}', space=sflag, size = 0x8, scoped, tag = 'scoped memory for tpu_custom_call.1']
    #allocation6 [shape = 's32[2]{0}', space=sflag, size = 0x8, scoped, tag = 'scoped memory for tpu_custom_call.1']
    #allocation7 [shape = 'u8[65536]{0}', space=vmem, size = 0x10000, scoped, tag = 'input window, operand 1, single buffered']
    #allocation8 [shape = 's32[1]{0}', space=sflag, size = 0x4, scoped, tag = 'scoped memory for tpu_custom_call.1']
    #allocation9 [shape = 'u8[65536]{0}', space=vmem, size = 0x10000, scoped, tag = 'input window, operand 2']
    #allocation10 [shape = 'u8[65536]{0}', space=vmem, size = 0x10000, scoped, tag = 'input window, operand 3, single buffered']
    #allocation11 [shape = 'u8[65536]{0}', space=vmem, size = 0x10000, scoped, tag = 'output window, operand 0']
    %10 = vsyncpa [#allocation5], 0
    %s11 = scalar_lea.sflag [#allocation5], 1
    %12 = vsyncpa %s11, 0
    %13 = vsyncpa [#allocation8], 0
    %14 = vsyncpa [#allocation6], 0
    %s15 = scalar_lea.sflag [#allocation6], 1
    %16 = vsyncpa %s15, 0
    loop: start=0, step=1, limit=4
    $region2: #{tpu_custom_call.1} parent=1 // loop_pre_header
      _
    $region3: #{tpu_custom_call.1} parent=1 // loop_header
      %s18 = sphi 0, %s22
      %p19 = scmp.ge.s32.totalorder %s18, 4
      %s25 = sphi 0, %s37
      %s26 = sphi 0, %s33
      %s27 = sphi 0, %s25
      %s28 = sphi 0, %s26
      %s29 = sphi 0, %s27
      %s30 = sphi 0, %s28
      %s42 = sphi 0, %s44
      %s45 = sphi 0, %s42
      %s46 = sphi 0, %s45
      %s62 = sphi 0, %s46
      %s68 = sphi 0, %s70
      %s71 = sphi 0, %s68
      %s72 = sphi 0, %s71
      %s88 = sphi 0, %s72
      %s94 = sphi 0, %s96
      %s97 = sphi 0, %s94
      %s98 = sphi 0, %s97
      %s114 = sphi 0, %s98
      %s118 = sphi 0, %s118
      %s120 = sphi 0, %s118
      %s121 = sphi 0, %s120
      %s135 = sphi 0, %s121
      %s139 = sphi 0, %s139
      %s141 = sphi 0, %s139
      %s142 = sphi 0, %s141
      %s156 = sphi 0, %s142
      %s162 = sphi 0, %s164
      %s165 = sphi 0, %s162
      %s166 = sphi 0, %s165
      %s182 = sphi 0, %s166
    $region4: #{tpu_custom_call.1} parent=1 // loop_header_branch
      %21 = sbr.rel (%p19) target = $region8
    $region5: #{tpu_custom_call.1} parent=1 // loop_body
      %s23 = ssub.s32 %s18, 1
      %s24 = ssub.s32 %s18, 2
      %s31 = sadd.s32 1, %s26
      %p32 = scmp.ge.s32.totalorder %s31, 1
      %s33 = scalar_select %p32, 0, %s31
      %s34 = sadd.s32 1, %s25
      %s35 = scalar_select %p32, %s34, %s25
      %p36 = scmp.ge.s32.totalorder %s35, 2
      %s37 = scalar_select %p36, 0, %s35
      %s38 = ssub.s32 %s25, %s37
      %s39 = ssub.s32 %s26, %s33
      %s40 = sor.u32 %s38, %s39
      %p41 = scmp.eq.s32.totalorder %s40, 0
      %s43 = sadd.s32 %s42, 1
      %s44 = scalar_select %p41, %s42, %s43
      %p47 = pneg %p41
      %p48 = scmp.eq.s32.totalorder %s18, 1
      %p49 = por %p47, %p48
      %p50 = scmp.ne.s32.totalorder %s42, %s45
      %p51 = scmp.eq.s32.totalorder %s18, 0
      %p52 = por %p50, %p51
      %p53 = scmp.ne.s32.totalorder %s42, %s45
      %p54 = scmp.eq.s32.totalorder %s23, 1
      %p55 = por %p53, %p54
      %p56 = scmp.ne.s32.totalorder %s45, %s46
      %p57 = scmp.eq.s32.totalorder %s23, 0
      %p58 = por %p56, %p57
      %p59 = scmp.ne.s32.totalorder %s45, %s46
      %p60 = scmp.eq.s32.totalorder %s24, 1
      %p61 = por %p59, %p60
      %p63 = scmp.ne.s32.totalorder %s46, %s62
      %p64 = scmp.eq.s32.totalorder %s24, 0
      %p65 = por %p63, %p64
      %s66 = ssub.s32 %s26, %s33
      %p67 = scmp.eq.s32.totalorder %s66, 0
      %s69 = sadd.s32 %s68, 1
      %s70 = scalar_select %p67, %s68, %s69
      %p73 = pneg %p67
      %p74 = scmp.eq.s32.totalorder %s18, 1
      %p75 = por %p73, %p74
      %p76 = scmp.ne.s32.totalorder %s68, %s71
      %p77 = scmp.eq.s32.totalorder %s18, 0
      %p78 = por %p76, %p77
      %p79 = scmp.ne.s32.totalorder %s68, %s71
      %p80 = scmp.eq.s32.totalorder %s23, 1
      %p81 = por %p79, %p80
      %p82 = scmp.ne.s32.totalorder %s71, %s72
      %p83 = scmp.eq.s32.totalorder %s23, 0
      %p84 = por %p82, %p83
      %p85 = scmp.ne.s32.totalorder %s71, %s72
      %p86 = scmp.eq.s32.totalorder %s24, 1
      %p87 = por %p85, %p86
      %p89 = scmp.ne.s32.totalorder %s72, %s88
      %p90 = scmp.eq.s32.totalorder %s24, 0
      %p91 = por %p89, %p90
      %s92 = ssub.s32 %s25, %s37
      %p93 = scmp.eq.s32.totalorder %s92, 0
      %s95 = sadd.s32 %s94, 1
      %s96 = scalar_select %p93, %s94, %s95
      %p99 = pneg %p93
      %p100 = scmp.eq.s32.totalorder %s18, 1
      %p101 = por %p99, %p100
      %p102 = scmp.ne.s32.totalorder %s94, %s97
      %p103 = scmp.eq.s32.totalorder %s18, 0
      %p104 = por %p102, %p103
      %p105 = scmp.ne.s32.totalorder %s94, %s97
      %p106 = scmp.eq.s32.totalorder %s23, 1
      %p107 = por %p105, %p106
      %p108 = scmp.ne.s32.totalorder %s97, %s98
      %p109 = scmp.eq.s32.totalorder %s23, 0
      %p110 = por %p108, %p109
      %p111 = scmp.ne.s32.totalorder %s97, %s98
      %p112 = scmp.eq.s32.totalorder %s24, 1
      %p113 = por %p111, %p112
      %p115 = scmp.ne.s32.totalorder %s98, %s114
      %p116 = scmp.eq.s32.totalorder %s24, 0
      %p117 = por %p115, %p116
      %s119 = sadd.s32 %s118, 1
      %p122 = scmp.eq.s32.totalorder %s18, 1
      %p123 = scmp.ne.s32.totalorder %s118, %s120
      %p124 = scmp.eq.s32.totalorder %s18, 0
      %p125 = por %p123, %p124
      %p126 = scmp.ne.s32.totalorder %s118, %s120
      %p127 = scmp.eq.s32.totalorder %s23, 1
      %p128 = por %p126, %p127
      %p129 = scmp.ne.s32.totalorder %s120, %s121
      %p130 = scmp.eq.s32.totalorder %s23, 0
      %p131 = por %p129, %p130
      %p132 = scmp.ne.s32.totalorder %s120, %s121
      %p133 = scmp.eq.s32.totalorder %s24, 1
      %p134 = por %p132, %p133
      %p136 = scmp.ne.s32.totalorder %s121, %s135
      %p137 = scmp.eq.s32.totalorder %s24, 0
      %p138 = por %p136, %p137
      %s140 = sadd.s32 %s139, 1
      %p143 = scmp.eq.s32.totalorder %s18, 1
      %p144 = scmp.ne.s32.totalorder %s139, %s141
      %p145 = scmp.eq.s32.totalorder %s18, 0
      %p146 = por %p144, %p145
      %p147 = scmp.ne.s32.totalorder %s139, %s141
      %p148 = scmp.eq.s32.totalorder %s23, 1
      %p149 = por %p147, %p148
      %p150 = scmp.ne.s32.totalorder %s141, %s142
      %p151 = scmp.eq.s32.totalorder %s23, 0
      %p152 = por %p150, %p151
      %p153 = scmp.ne.s32.totalorder %s141, %s142
      %p154 = scmp.eq.s32.totalorder %s24, 1
      %p155 = por %p153, %p154
      %p157 = scmp.ne.s32.totalorder %s142, %s156
      %p158 = scmp.eq.s32.totalorder %s24, 0
      %p159 = por %p157, %p158
      %s160 = ssub.s32 %s25, %s37
      %p161 = scmp.eq.s32.totalorder %s160, 0
      %s163 = sadd.s32 %s162, 1
      %s164 = scalar_select %p161, %s162, %s163
      %p167 = pneg %p161
      %p168 = scmp.eq.s32.totalorder %s18, 1
      %p169 = por %p167, %p168
      %p170 = scmp.ne.s32.totalorder %s162, %s165
      %p171 = scmp.eq.s32.totalorder %s18, 0
      %p172 = por %p170, %p171
      %p173 = scmp.ne.s32.totalorder %s162, %s165
      %p174 = scmp.eq.s32.totalorder %s23, 1
      %p175 = por %p173, %p174
      %p176 = scmp.ne.s32.totalorder %s165, %s166
      %p177 = scmp.eq.s32.totalorder %s23, 0
      %p178 = por %p176, %p177
      %p179 = scmp.ne.s32.totalorder %s165, %s166
      %p180 = scmp.eq.s32.totalorder %s24, 1
      %p181 = por %p179, %p180
      %p183 = scmp.ne.s32.totalorder %s166, %s182
      %p184 = scmp.eq.s32.totalorder %s24, 0
      %p185 = por %p183, %p184
      %p186 = scmp.le.s32.totalorder 1, %s18
      %p187 = scmp.lt.s32.totalorder %s18, 3
      %p188 = pnand %p186, %p187
      %p189 = pneg %p188
      // Predicated region
      $region9: #{tpu_custom_call.1} parent=5 // pred_check
        _
      $region10: #{tpu_custom_call.1} parent=5 // pred_check_branch
        %191 = sbr.rel (%p188) target = $region12
      $region11: #{tpu_custom_call.1} parent=5 // pred_region
        %s192 = ssub.s32 %s18, 1
        // Predicated region
        $region13: #{tpu_custom_call.1} parent=11 // pred_check
          %p193 = pneg %p84
        $region14: #{tpu_custom_call.1} parent=11 // pred_check_branch
          %195 = sbr.rel (%p193) target = $region16
        $region15: #{tpu_custom_call.1} parent=11 // pred_region
          %s196 = smul.u32 32, %s28
          %s198 = ssub.s32 2048, 2048
          %199 = vsyncadd [#allocation8], %s198
          %s200 = smul.addr %s196, 64
          %s201 = scalar_lea.hbm %s1, %s200
          %s202 = sshll.u32 [#allocation7], 4
          %s203 = int_to_ptr.vmem [resolvable:$true] %s202
          %208 = dma.hbm_to_vmem [thread:$0]  %s201, 2048, %s203, [#allocation8], 64, 64, 4
        $region16: #{tpu_custom_call.1} parent=11 // pred_fallthru
          _
        // Predicated region
        $region17: #{tpu_custom_call.1} parent=11 // pred_check
          %p209 = pneg %p131
        $region18: #{tpu_custom_call.1} parent=11 // pred_check_branch
          %211 = sbr.rel (%p209) target = $region20
        $region19: #{tpu_custom_call.1} parent=11 // pred_region
          %s213 = ssub.s32 2048, 2048
          %214 = vsyncadd [#allocation8], %s213
          %s215 = sshll.u32 [#allocation10], 4
          %s216 = int_to_ptr.vmem [resolvable:$true] %s215
          %221 = dma.hbm_to_vmem [thread:$0]  %s3, 2048, %s216, [#allocation8], 64, 64, 4
        $region20: #{tpu_custom_call.1} parent=11 // pred_fallthru
          _
        // Predicated region
        $region21: #{tpu_custom_call.1} parent=11 // pred_check
          %p222 = pneg %p152
        $region22: #{tpu_custom_call.1} parent=11 // pred_check_branch
          %224 = sbr.rel (%p222) target = $region24
        $region23: #{tpu_custom_call.1} parent=11 // pred_region
          _
        $region24: #{tpu_custom_call.1} parent=11 // pred_fallthru
          _
      $region12: #{tpu_custom_call.1} parent=5 // pred_fallthru
        _
      %p225 = scmp.lt.s32.totalorder %s18, 2
      // Predicated region
      $region25: #{tpu_custom_call.1} parent=5 // pred_check
        %p226 = pneg %p225
      $region26: #{tpu_custom_call.1} parent=5 // pred_check_branch
        %228 = sbr.rel (%p226) target = $region28
      $region27: #{tpu_custom_call.1} parent=5 // pred_region
        // Predicated region
        $region29: #{tpu_custom_call.1} parent=27 // pred_check
          %p229 = pneg %p52
        $region30: #{tpu_custom_call.1} parent=27 // pred_check_branch
          %231 = sbr.rel (%p229) target = $region32
        $region31: #{tpu_custom_call.1} parent=27 // pred_region
          %s232 = sand.u32 %s18, 1
          %s233 = scalar_lea.sflag [#allocation5], %s232
          %s234 = sand.u32 %s42, 1
          %s235 = smul.addr %s234, 128
          %s236 = scalar_lea.vmem [#allocation4], %s235
          %s237 = smul.u32 16, %s25
          %s238 = smul.u32 2, %s26
          %s240 = ssub.s32 2048, 2048
          %241 = vsyncadd %s233, %s240
          %s242 = smul.addr %s237, 2
          %s243 = sadd.s32 %s238, %s242
          %s244 = smul.addr %s243, 64
          %s245 = scalar_lea.hbm %s0, %s244
          %s246 = sshll.u32 %s236, 4
          %s247 = int_to_ptr.vmem [resolvable:$true] %s246
          %252 = dma.hbm_to_vmem [thread:$0]  %s245, 2048, %s247, %s233, 128, 128, 8
        $region32: #{tpu_custom_call.1} parent=27 // pred_fallthru
          _
        // Predicated region
        $region33: #{tpu_custom_call.1} parent=27 // pred_check
          %p253 = pneg %p104
        $region34: #{tpu_custom_call.1} parent=27 // pred_check_branch
          %255 = sbr.rel (%p253) target = $region36
        $region35: #{tpu_custom_call.1} parent=27 // pred_region
          %s256 = sand.u32 %s18, 1
          %s257 = scalar_lea.sflag [#allocation5], %s256
          %s258 = sand.u32 %s94, 1
          %s259 = smul.addr %s258, 64
          %s260 = scalar_lea.vmem [#allocation9], %s259
          %s261 = smul.u32 16, %s25
          %s263 = ssub.s32 1024, 1024
          %264 = vsyncadd %s257, %s263
          %s265 = smul.addr %s261, 64
          %s266 = scalar_lea.hbm %s2, %s265
          %s267 = sshll.u32 %s260, 4
          %s268 = int_to_ptr.vmem [resolvable:$true] %s267
          %273 = dma.hbm_to_vmem [thread:$0]  %s266, 1024, %s268, %s257, 64, 64, 4
        $region36: #{tpu_custom_call.1} parent=27 // pred_fallthru
          _
      $region28: #{tpu_custom_call.1} parent=5 // pred_fallthru
        _
      %p274 = scmp.le.s32.totalorder 1, %s18
      %p275 = scmp.lt.s32.totalorder %s18, 3
      %p276 = pnand %p274, %p275
      %p277 = pneg %p276
      // Predicated region
      $region37: #{tpu_custom_call.1} parent=5 // pred_check
        _
      $region38: #{tpu_custom_call.1} parent=5 // pred_check_branch
        %279 = sbr.rel (%p276) target = $region40
      $region39: #{tpu_custom_call.1} parent=5 // pred_region
        %s280 = ssub.s32 %s18, 1
        %s281 = sand.u32 %s23, 1
        %s282 = scalar_lea.sflag [#allocation5], %s281
        %s283 = sand.u32 %s45, 1
        %s284 = smul.addr %s283, 128
        %s285 = scalar_lea.vmem [#allocation4], %s284
        // Predicated region
        $region41: #{tpu_custom_call.1} parent=39 // pred_check
          %p286 = pneg %p58
        $region42: #{tpu_custom_call.1} parent=39 // pred_check_branch
          %288 = sbr.rel (%p286) target = $region44
        $region43: #{tpu_custom_call.1} parent=39 // pred_region
          %289 = dma.done %s282, 2048
        $region44: #{tpu_custom_call.1} parent=39 // pred_fallthru
          _
        // Predicated region
        $region45: #{tpu_custom_call.1} parent=39 // pred_check
          %p290 = pneg %p84
        $region46: #{tpu_custom_call.1} parent=39 // pred_check_branch
          %292 = sbr.rel (%p290) target = $region48
        $region47: #{tpu_custom_call.1} parent=39 // pred_region
          %293 = dma.done [#allocation8], 2048
        $region48: #{tpu_custom_call.1} parent=39 // pred_fallthru
          _
        %s294 = sand.u32 %s23, 1
        %s295 = scalar_lea.sflag [#allocation5], %s294
        %s296 = sand.u32 %s97, 1
        %s297 = smul.addr %s296, 64
        %s298 = scalar_lea.vmem [#allocation9], %s297
        // Predicated region
        $region49: #{tpu_custom_call.1} parent=39 // pred_check
          %p299 = pneg %p110
        $region50: #{tpu_custom_call.1} parent=39 // pred_check_branch
          %301 = sbr.rel (%p299) target = $region52
        $region51: #{tpu_custom_call.1} parent=39 // pred_region
          %302 = dma.done %s295, 1024
        $region52: #{tpu_custom_call.1} parent=39 // pred_fallthru
          _
        // Predicated region
        $region53: #{tpu_custom_call.1} parent=39 // pred_check
          %p303 = pneg %p131
        $region54: #{tpu_custom_call.1} parent=39 // pred_check_branch
          %305 = sbr.rel (%p303) target = $region56
        $region55: #{tpu_custom_call.1} parent=39 // pred_region
          %306 = dma.done [#allocation8], 2048
        $region56: #{tpu_custom_call.1} parent=39 // pred_fallthru
          _
        %s307 = sand.u32 %s23, 1
        %s308 = scalar_lea.sflag [#allocation5], %s307
        %s309 = sand.u32 %s45, 1
        %s310 = smul.addr %s309, 128
        %s311 = scalar_lea.vmem [#allocation4], %s310
        %p312 = pneg %p58
        %p313 = pneg %p55
        %p314 = pneg %p84
        %p315 = pneg %p81
        %s316 = sand.u32 %s23, 1
        %s317 = scalar_lea.sflag [#allocation5], %s316
        %s318 = sand.u32 %s97, 1
        %s319 = smul.addr %s318, 64
        %s320 = scalar_lea.vmem [#allocation9], %s319
        %p321 = pneg %p110
        %p322 = pneg %p107
        %p323 = pneg %p131
        %p324 = pneg %p128
        %p325 = pneg %p152
        %p326 = pneg %p149
        %p327 = pneg %p178
        %p328 = pneg %p175
        %s329 = sand.u32 %s165, 1
        %s330 = scalar_lea.sflag [#allocation6], %s329
        %s331 = sand.u32 %s165, 1
        %s332 = smul.addr %s331, 64
        %s333 = scalar_lea.vmem [#allocation11], %s332
        %s334 = smul.u32 16, %s27
        %s335 = smul.u32 2, %s28
        %s336 = smul.u32 32, %s28
        %s337 = smul.u32 16, %s27
        %s338 = smul.u32 16, %s27
        %p340 = scmp.eq.s32.totalorder %s28, 0
        // Predicated region
        $region57: #{tpu_custom_call.1} parent=39 // pred_check
          %p341 = pneg %p340
        $region58: #{tpu_custom_call.1} parent=39 // pred_check_branch
          %343 = sbr.rel (%p341) target = $region60
        $region59: #{tpu_custom_call.1} parent=39 // pred_region
          %344 = vst [vmem:[#allocation2] sm:$0xff] 0.0
          %345 = vst [vmem:[#allocation2 + $0x8] sm:$0xff] 0.0
          %346 = vst [vmem:[#allocation2 + $0x10] sm:$0xff] 0.0
          %347 = vst [vmem:[#allocation2 + $0x18] sm:$0xff] 0.0
          %348 = vst [vmem:[#allocation2 + $0x20] sm:$0xff] 0.0
          %349 = vst [vmem:[#allocation2 + $0x28] sm:$0xff] 0.0
          %350 = vst [vmem:[#allocation2 + $0x30] sm:$0xff] 0.0
          %351 = vst [vmem:[#allocation2 + $0x38] sm:$0xff] 0.0
          %352 = vst [vmem:[#allocation2 + $0x40] sm:$0xff] 0.0
          %353 = vst [vmem:[#allocation2 + $0x48] sm:$0xff] 0.0
          %354 = vst [vmem:[#allocation2 + $0x50] sm:$0xff] 0.0
          %355 = vst [vmem:[#allocation2 + $0x58] sm:$0xff] 0.0
          %356 = vst [vmem:[#allocation2 + $0x60] sm:$0xff] 0.0
          %357 = vst [vmem:[#allocation2 + $0x68] sm:$0xff] 0.0
          %358 = vst [vmem:[#allocation2 + $0x70] sm:$0xff] 0.0
          %359 = vst [vmem:[#allocation2 + $0x78] sm:$0xff] 0.0
        $region60: #{tpu_custom_call.1} parent=39 // pred_fallthru
          _
        %v360 = vld [vmem:[#allocation2] sm:$0xff]
        %v361 = vld [vmem:[#allocation2 + $0x8] sm:$0xff]
        %v362 = vld [vmem:[#allocation2 + $0x10] sm:$0xff]
        %v363 = vld [vmem:[#allocation2 + $0x18] sm:$0xff]
        %v364 = vld [vmem:[#allocation2 + $0x20] sm:$0xff]
        %v365 = vld [vmem:[#allocation2 + $0x28] sm:$0xff]
        %v366 = vld [vmem:[#allocation2 + $0x30] sm:$0xff]
        %v367 = vld [vmem:[#allocation2 + $0x38] sm:$0xff]
        %v368 = vld [vmem:[#allocation2 + $0x40] sm:$0xff]
        %v369 = vld [vmem:[#allocation2 + $0x48] sm:$0xff]
        %v370 = vld [vmem:[#allocation2 + $0x50] sm:$0xff]
        %v371 = vld [vmem:[#allocation2 + $0x58] sm:$0xff]
        %v372 = vld [vmem:[#allocation2 + $0x60] sm:$0xff]
        %v373 = vld [vmem:[#allocation2 + $0x68] sm:$0xff]
        %v374 = vld [vmem:[#allocation2 + $0x70] sm:$0xff]
        %v375 = vld [vmem:[#allocation2 + $0x78] sm:$0xff]
        %v376 = vld [vmem:[%s285] sm:$0xff]
        %v377 = vld [vmem:[%s285 + $0x8] sm:$0xff]
        %v378 = vld [vmem:[%s285 + $0x10] sm:$0xff]
        %v379 = vld [vmem:[%s285 + $0x18] sm:$0xff]
        %v380 = vld [vmem:[%s285 + $0x20] sm:$0xff]
        %v381 = vld [vmem:[%s285 + $0x28] sm:$0xff]
        %v382 = vld [vmem:[%s285 + $0x30] sm:$0xff]
        %v383 = vld [vmem:[%s285 + $0x38] sm:$0xff]
        %v384 = vld [vmem:[%s285 + $0x40] sm:$0xff]
        %v385 = vld [vmem:[%s285 + $0x48] sm:$0xff]
        %v386 = vld [vmem:[%s285 + $0x50] sm:$0xff]
        %v387 = vld [vmem:[%s285 + $0x58] sm:$0xff]
        %v388 = vld [vmem:[%s285 + $0x60] sm:$0xff]
        %v389 = vld [vmem:[%s285 + $0x68] sm:$0xff]
        %v390 = vld [vmem:[%s285 + $0x70] sm:$0xff]
        %v391 = vld [vmem:[%s285 + $0x78] sm:$0xff]
        %v392 = vld [vmem:[#allocation7] sm:$0xf]
        %v393 = vld [vmem:[#allocation7 + $0x4] sm:$0xf]
        %v394 = vld [vmem:[#allocation7 + $0x8] sm:$0xf]
        %v395 = vld [vmem:[#allocation7 + $0xc] sm:$0xf]
        %v396 = vld [vmem:[#allocation7 + $0x10] sm:$0xf]
        %v397 = vld [vmem:[#allocation7 + $0x14] sm:$0xf]
        %v398 = vld [vmem:[#allocation7 + $0x18] sm:$0xf]
        %v399 = vld [vmem:[#allocation7 + $0x1c] sm:$0xf]
        %v400 = vld [vmem:[#allocation7 + $0x20] sm:$0xf]
        %v401 = vld [vmem:[#allocation7 + $0x24] sm:$0xf]
        %v402 = vld [vmem:[#allocation7 + $0x28] sm:$0xf]
        %v403 = vld [vmem:[#allocation7 + $0x2c] sm:$0xf]
        %v404 = vld [vmem:[#allocation7 + $0x30] sm:$0xf]
        %v405 = vld [vmem:[#allocation7 + $0x34] sm:$0xf]
        %v406 = vld [vmem:[#allocation7 + $0x38] sm:$0xf]
        %v407 = vld [vmem:[#allocation7 + $0x3c] sm:$0xf]
        %v408 = vld [vmem:[#allocation7 + $0x40] sm:$0xf]
        %v409 = vld [vmem:[#allocation7 + $0x44] sm:$0xf]
        %v410 = vld [vmem:[#allocation7 + $0x48] sm:$0xf]
        %v411 = vld [vmem:[#allocation7 + $0x4c] sm:$0xf]
        %v412 = vld [vmem:[#allocation7 + $0x50] sm:$0xf]
        %v413 = vld [vmem:[#allocation7 + $0x54] sm:$0xf]
        %v414 = vld [vmem:[#allocation7 + $0x58] sm:$0xf]
        %v415 = vld [vmem:[#allocation7 + $0x5c] sm:$0xf]
        %v416 = vld [vmem:[#allocation7 + $0x60] sm:$0xf]
        %v417 = vld [vmem:[#allocation7 + $0x64] sm:$0xf]
        %v418 = vld [vmem:[#allocation7 + $0x68] sm:$0xf]
        %v419 = vld [vmem:[#allocation7 + $0x6c] sm:$0xf]
        %v420 = vld [vmem:[#allocation7 + $0x70] sm:$0xf]
        %v421 = vld [vmem:[#allocation7 + $0x74] sm:$0xf]
        %v422 = vld [vmem:[#allocation7 + $0x78] sm:$0xf]
        %v423 = vld [vmem:[#allocation7 + $0x7c] sm:$0xf]
        %v440 = vunpack.c.l.b16 %v376
        %v441 = vunpack.c.h.b16 %v376
        %v442 = vunpack.c.l.b16 %v377
        %v443 = vunpack.c.h.b16 %v377
        %v444 = vunpack.c.l.b16 %v378
        %v445 = vunpack.c.h.b16 %v378
        %v446 = vunpack.c.l.b16 %v379
        %v447 = vunpack.c.h.b16 %v379
        %v448 = vunpack.c.l.b16 %v380
        %v449 = vunpack.c.h.b16 %v380
        %v450 = vunpack.c.l.b16 %v381
        %v451 = vunpack.c.h.b16 %v381
        %v452 = vunpack.c.l.b16 %v382
        %v453 = vunpack.c.h.b16 %v382
        %v454 = vunpack.c.l.b16 %v383
        %v455 = vunpack.c.h.b16 %v383
        %v456 = vunpack.c.l.b16 %v384
        %v457 = vunpack.c.h.b16 %v384
        %v458 = vunpack.c.l.b16 %v385
        %v459 = vunpack.c.h.b16 %v385
        %v460 = vunpack.c.l.b16 %v386
        %v461 = vunpack.c.h.b16 %v386
        %v462 = vunpack.c.l.b16 %v387
        %v463 = vunpack.c.h.b16 %v387
        %v464 = vunpack.c.l.b16 %v388
        %v465 = vunpack.c.h.b16 %v388
        %v466 = vunpack.c.l.b16 %v389
        %v467 = vunpack.c.h.b16 %v389
        %v468 = vunpack.c.l.b16 %v390
        %v469 = vunpack.c.h.b16 %v390
        %v470 = vunpack.c.l.b16 %v391
        %v471 = vunpack.c.h.b16 %v391
        %v472 = vpack.c.b16 %v442, %v440
        %v473 = vpack.c.b16 %v443, %v441
        %v474 = vpack.c.b16 %v446, %v444
        %v475 = vpack.c.b16 %v447, %v445
        %v476 = vpack.c.b16 %v450, %v448
        %v477 = vpack.c.b16 %v451, %v449
        %v478 = vpack.c.b16 %v454, %v452
        %v479 = vpack.c.b16 %v455, %v453
        %v480 = vpack.c.b16 %v458, %v456
        %v481 = vpack.c.b16 %v459, %v457
        %v482 = vpack.c.b16 %v462, %v460
        %v483 = vpack.c.b16 %v463, %v461
        %v484 = vpack.c.b16 %v466, %v464
        %v485 = vpack.c.b16 %v467, %v465
        %v486 = vpack.c.b16 %v470, %v468
        %v487 = vpack.c.b16 %v471, %v469
        %v536 = vunpack.c.l.b16 %v392
        %v537 = vunpack.c.l.b16 %v393
        %v538 = vunpack.c.l.b16 %v394
        %v539 = vunpack.c.l.b16 %v395
        %v540 = vunpack.c.l.b16 %v396
        %v541 = vunpack.c.l.b16 %v397
        %v542 = vunpack.c.l.b16 %v398
        %v543 = vunpack.c.l.b16 %v399
        %v544 = vunpack.c.l.b16 %v400
        %v545 = vunpack.c.l.b16 %v401
        %v546 = vunpack.c.l.b16 %v402
        %v547 = vunpack.c.l.b16 %v403
        %v548 = vunpack.c.l.b16 %v404
        %v549 = vunpack.c.l.b16 %v405
        %v550 = vunpack.c.l.b16 %v406
        %v551 = vunpack.c.l.b16 %v407
        %v552 = vunpack.c.l.b16 %v408
        %v553 = vunpack.c.l.b16 %v409
        %v554 = vunpack.c.l.b16 %v410
        %v555 = vunpack.c.l.b16 %v411
        %v556 = vunpack.c.l.b16 %v412
        %v557 = vunpack.c.l.b16 %v413
        %v558 = vunpack.c.l.b16 %v414
        %v559 = vunpack.c.l.b16 %v415
        %v560 = vunpack.c.l.b16 %v416
        %v561 = vunpack.c.l.b16 %v417
        %v562 = vunpack.c.l.b16 %v418
        %v563 = vunpack.c.l.b16 %v419
        %v564 = vunpack.c.l.b16 %v420
        %v565 = vunpack.c.l.b16 %v421
        %v566 = vunpack.c.l.b16 %v422
        %v567 = vunpack.c.l.b16 %v423
        %v568 = vpack.c.b16 %v537, %v536
        %v569 = vpack.c.b16 %v539, %v538
        %v570 = vpack.c.b16 %v541, %v540
        %v571 = vpack.c.b16 %v543, %v542
        %v572 = vpack.c.b16 %v545, %v544
        %v573 = vpack.c.b16 %v547, %v546
        %v574 = vpack.c.b16 %v549, %v548
        %v575 = vpack.c.b16 %v551, %v550
        %v576 = vpack.c.b16 %v553, %v552
        %v577 = vpack.c.b16 %v555, %v554
        %v578 = vpack.c.b16 %v557, %v556
        %v579 = vpack.c.b16 %v559, %v558
        %v580 = vpack.c.b16 %v561, %v560
        %v581 = vpack.c.b16 %v563, %v562
        %v582 = vpack.c.b16 %v565, %v564
        %v583 = vpack.c.b16 %v567, %v566
        %600 = vmatprep.subr.bf16.mxu0 0
        %601 = vmatpush1.bf16.msra.mxu0 %v568
        %602 = vmatprep.subr.bf16.mxu0 0
        %603 = vmatpush1.bf16.msra.mxu0 %v569
        %604 = vmatprep.subr.bf16.mxu0 0
        %605 = vmatpush1.bf16.msra.mxu0 %v570
        %606 = vmatprep.subr.bf16.mxu0 0
        %607 = vmatpush1.bf16.msra.mxu0 %v571
        %608 = vmatprep.subr.bf16.mxu0 0
        %609 = vmatpush1.bf16.msra.mxu0 %v572
        %610 = vmatprep.subr.bf16.mxu0 0
        %611 = vmatpush1.bf16.msra.mxu0 %v573
        %612 = vmatprep.subr.bf16.mxu0 0
        %613 = vmatpush1.bf16.msra.mxu0 %v574
        %614 = vmatprep.subr.bf16.mxu0 0
        %615 = vmatpush1.bf16.msra.mxu0 %v575
        %616 = vmatprep.subr.bf16.mxu0 0
        %617 = vmatpush1.bf16.msra.mxu0 %v576
        %618 = vmatprep.subr.bf16.mxu0 0
        %619 = vmatpush1.bf16.msra.mxu0 %v577
        %620 = vmatprep.subr.bf16.mxu0 0
        %621 = vmatpush1.bf16.msra.mxu0 %v578
        %622 = vmatprep.subr.bf16.mxu0 0
        %623 = vmatpush1.bf16.msra.mxu0 %v579
        %624 = vmatprep.subr.bf16.mxu0 0
        %625 = vmatpush1.bf16.msra.mxu0 %v580
        %626 = vmatprep.subr.bf16.mxu0 0
        %627 = vmatpush1.bf16.msra.mxu0 %v581
        %628 = vmatprep.subr.bf16.mxu0 0
        %629 = vmatpush1.bf16.msra.mxu0 %v582
        %630 = vmatprep.subr.bf16.mxu0 0
        %631 = vmatpush1.bf16.msra.mxu0 %v583
        %632 = vmatprep.mubr.bf16.mxu0 %v473
        %633 = vmatmul.mubr.bf16.gmra.mrb[0].mxu0 %v472
        %v634 = vpop.f32.mrb[0].mxu0
        %v635 = vadd.f32 0.0, %v634
        %v636 = vpop.f32.mrb[0].mxu0
        %v637 = vpop.f32.mrb[0].mxu0
        %v638 = vadd.f32 0.0, %v637
        %v639 = vpop.f32.mrb[0].mxu0
        %640 = vmatprep.mubr.bf16.mxu0 %v475
        %641 = vmatmul.mubr.bf16.gmra.mrb[0].mxu0 %v474
        %v642 = vpop.f32.mrb[0].mxu0
        %v643 = vadd.f32 0.0, %v642
        %v644 = vpop.f32.mrb[0].mxu0
        %v645 = vpop.f32.mrb[0].mxu0
        %v646 = vadd.f32 0.0, %v645
        %v647 = vpop.f32.mrb[0].mxu0
        %648 = vmatprep.mubr.bf16.mxu0 %v477
        %649 = vmatmul.mubr.bf16.gmra.mrb[0].mxu0 %v476
        %v650 = vpop.f32.mrb[0].mxu0
        %v651 = vadd.f32 0.0, %v650
        %v652 = vpop.f32.mrb[0].mxu0
        %v653 = vpop.f32.mrb[0].mxu0
        %v654 = vadd.f32 0.0, %v653
        %v655 = vpop.f32.mrb[0].mxu0
        %656 = vmatprep.mubr.bf16.mxu0 %v479
        %657 = vmatmul.mubr.bf16.gmra.mrb[0].mxu0 %v478
        %v658 = vpop.f32.mrb[0].mxu0
        %v659 = vadd.f32 0.0, %v658
        %v660 = vpop.f32.mrb[0].mxu0
        %v661 = vpop.f32.mrb[0].mxu0
        %v662 = vadd.f32 0.0, %v661
        %v663 = vpop.f32.mrb[0].mxu0
        %664 = vmatprep.mubr.bf16.mxu0 %v481
        %665 = vmatmul.mubr.bf16.gmra.mrb[0].mxu0 %v480
        %v666 = vpop.f32.mrb[0].mxu0
        %v667 = vadd.f32 0.0, %v666
        %v668 = vpop.f32.mrb[0].mxu0
        %v669 = vpop.f32.mrb[0].mxu0
        %v670 = vadd.f32 0.0, %v669
        %v671 = vpop.f32.mrb[0].mxu0
        %672 = vmatprep.mubr.bf16.mxu0 %v483
        %673 = vmatmul.mubr.bf16.gmra.mrb[0].mxu0 %v482
        %v674 = vpop.f32.mrb[0].mxu0
        %v675 = vadd.f32 0.0, %v674
        %v676 = vpop.f32.mrb[0].mxu0
        %v677 = vpop.f32.mrb[0].mxu0
        %v678 = vadd.f32 0.0, %v677
        %v679 = vpop.f32.mrb[0].mxu0
        %680 = vmatprep.mubr.bf16.mxu0 %v485
        %681 = vmatmul.mubr.bf16.gmra.mrb[0].mxu0 %v484
        %v682 = vpop.f32.mrb[0].mxu0
        %v683 = vadd.f32 0.0, %v682
        %v684 = vpop.f32.mrb[0].mxu0
        %v685 = vpop.f32.mrb[0].mxu0
        %v686 = vadd.f32 0.0, %v685
        %v687 = vpop.f32.mrb[0].mxu0
        %688 = vmatprep.mubr.bf16.mxu0 %v487
        %689 = vmatmul.mubr.bf16.gmra.mrb[0].mxu0 %v486
        %v690 = vpop.f32.mrb[0].mxu0
        %v691 = vadd.f32 0.0, %v690
        %v692 = vpop.f32.mrb[0].mxu0
        %v693 = vpop.f32.mrb[0].mxu0
        %v694 = vadd.f32 0.0, %v693
        %v695 = vpop.f32.mrb[0].mxu0
        %696 = vdwg.mxu0
        %v697 = vadd.f32 %v360, %v635
        %v698 = vadd.f32 %v361, %v638
        %v699 = vadd.f32 %v362, %v643
        %v700 = vadd.f32 %v363, %v646
        %v701 = vadd.f32 %v364, %v651
        %v702 = vadd.f32 %v365, %v654
        %v703 = vadd.f32 %v366, %v659
        %v704 = vadd.f32 %v367, %v662
        %v705 = vadd.f32 %v368, %v667
        %v706 = vadd.f32 %v369, %v670
        %v707 = vadd.f32 %v370, %v675
        %v708 = vadd.f32 %v371, %v678
        %v709 = vadd.f32 %v372, %v683
        %v710 = vadd.f32 %v373, %v686
        %v711 = vadd.f32 %v374, %v691
        %v712 = vadd.f32 %v375, %v694
        %713 = vst [vmem:[#allocation2] sm:$0xff] %v697
        %714 = vst [vmem:[#allocation2 + $0x8] sm:$0xff] %v698
        %715 = vst [vmem:[#allocation2 + $0x10] sm:$0xff] %v699
        %716 = vst [vmem:[#allocation2 + $0x18] sm:$0xff] %v700
        %717 = vst [vmem:[#allocation2 + $0x20] sm:$0xff] %v701
        %718 = vst [vmem:[#allocation2 + $0x28] sm:$0xff] %v702
        %719 = vst [vmem:[#allocation2 + $0x30] sm:$0xff] %v703
        %720 = vst [vmem:[#allocation2 + $0x38] sm:$0xff] %v704
        %721 = vst [vmem:[#allocation2 + $0x40] sm:$0xff] %v705
        %722 = vst [vmem:[#allocation2 + $0x48] sm:$0xff] %v706
        %723 = vst [vmem:[#allocation2 + $0x50] sm:$0xff] %v707
        %724 = vst [vmem:[#allocation2 + $0x58] sm:$0xff] %v708
        %725 = vst [vmem:[#allocation2 + $0x60] sm:$0xff] %v709
        %726 = vst [vmem:[#allocation2 + $0x68] sm:$0xff] %v710
        %727 = vst [vmem:[#allocation2 + $0x70] sm:$0xff] %v711
        %728 = vst [vmem:[#allocation2 + $0x78] sm:$0xff] %v712
        // Predicated region
        $region61: #{tpu_custom_call.1} parent=39 // pred_check
          %p729 = pneg %p340
        $region62: #{tpu_custom_call.1} parent=39 // pred_check_branch
          %731 = sbr.rel (%p729) target = $region64
        $region63: #{tpu_custom_call.1} parent=39 // pred_region
          %v732 = vld [vmem:[%s298] sm:$0xf]
          %v733 = vld [vmem:[%s298 + $0x4] sm:$0xf]
          %v734 = vld [vmem:[%s298 + $0x8] sm:$0xf]
          %v735 = vld [vmem:[%s298 + $0xc] sm:$0xf]
          %v736 = vld [vmem:[%s298 + $0x10] sm:$0xf]
          %v737 = vld [vmem:[%s298 + $0x14] sm:$0xf]
          %v738 = vld [vmem:[%s298 + $0x18] sm:$0xf]
          %v739 = vld [vmem:[%s298 + $0x1c] sm:$0xf]
          %v740 = vld [vmem:[%s298 + $0x20] sm:$0xf]
          %v741 = vld [vmem:[%s298 + $0x24] sm:$0xf]
          %v742 = vld [vmem:[%s298 + $0x28] sm:$0xf]
          %v743 = vld [vmem:[%s298 + $0x2c] sm:$0xf]
          %v744 = vld [vmem:[%s298 + $0x30] sm:$0xf]
          %v745 = vld [vmem:[%s298 + $0x34] sm:$0xf]
          %v746 = vld [vmem:[%s298 + $0x38] sm:$0xf]
          %v747 = vld [vmem:[%s298 + $0x3c] sm:$0xf]
          %v764 = vunpack.c.l.b16 %v732
          %v765 = vunpack.c.l.b16 %v733
          %v766 = vunpack.c.l.b16 %v734
          %v767 = vunpack.c.l.b16 %v735
          %v768 = vunpack.c.l.b16 %v736
          %v769 = vunpack.c.l.b16 %v737
          %v770 = vunpack.c.l.b16 %v738
          %v771 = vunpack.c.l.b16 %v739
          %v772 = vunpack.c.l.b16 %v740
          %v773 = vunpack.c.l.b16 %v741
          %v774 = vunpack.c.l.b16 %v742
          %v775 = vunpack.c.l.b16 %v743
          %v776 = vunpack.c.l.b16 %v744
          %v777 = vunpack.c.l.b16 %v745
          %v778 = vunpack.c.l.b16 %v746
          %v779 = vunpack.c.l.b16 %v747
          %v780 = vpack.c.b16 %v765, %v764
          %v781 = vpack.c.b16 %v767, %v766
          %v782 = vpack.c.b16 %v769, %v768
          %v783 = vpack.c.b16 %v771, %v770
          %v784 = vpack.c.b16 %v773, %v772
          %v785 = vpack.c.b16 %v775, %v774
          %v786 = vpack.c.b16 %v777, %v776
          %v787 = vpack.c.b16 %v779, %v778
          %796 = vst [vmem:[#allocation3] sm:$0xff] %v780
          %797 = vst [vmem:[#allocation3 + $0x10] sm:$0xff] %v781
          %798 = vst [vmem:[#allocation3 + $0x20] sm:$0xff] %v782
          %799 = vst [vmem:[#allocation3 + $0x30] sm:$0xff] %v783
          %800 = vst [vmem:[#allocation3 + $0x40] sm:$0xff] %v784
          %801 = vst [vmem:[#allocation3 + $0x50] sm:$0xff] %v785
          %802 = vst [vmem:[#allocation3 + $0x60] sm:$0xff] %v786
          %803 = vst [vmem:[#allocation3 + $0x70] sm:$0xff] %v787
          %v804 = vld [vmem:[#allocation2] sm:$0xff]
          %v805 = vld [vmem:[#allocation2 + $0x8] sm:$0xff]
          %v806 = vld [vmem:[#allocation2 + $0x10] sm:$0xff]
          %v807 = vld [vmem:[#allocation2 + $0x18] sm:$0xff]
          %v808 = vld [vmem:[#allocation2 + $0x20] sm:$0xff]
          %v809 = vld [vmem:[#allocation2 + $0x28] sm:$0xff]
          %v810 = vld [vmem:[#allocation2 + $0x30] sm:$0xff]
          %v811 = vld [vmem:[#allocation2 + $0x38] sm:$0xff]
          %v812 = vld [vmem:[#allocation2 + $0x40] sm:$0xff]
          %v813 = vld [vmem:[#allocation2 + $0x48] sm:$0xff]
          %v814 = vld [vmem:[#allocation2 + $0x50] sm:$0xff]
          %v815 = vld [vmem:[#allocation2 + $0x58] sm:$0xff]
          %v816 = vld [vmem:[#allocation2 + $0x60] sm:$0xff]
          %v817 = vld [vmem:[#allocation2 + $0x68] sm:$0xff]
          %v818 = vld [vmem:[#allocation2 + $0x70] sm:$0xff]
          %v819 = vld [vmem:[#allocation2 + $0x78] sm:$0xff]
          %v820 = vpack.c.bf16 %v805, %v804
          %v821 = vpack.c.bf16 %v807, %v806
          %v822 = vpack.c.bf16 %v809, %v808
          %v823 = vpack.c.bf16 %v811, %v810
          %v824 = vpack.c.bf16 %v813, %v812
          %v825 = vpack.c.bf16 %v815, %v814
          %v826 = vpack.c.bf16 %v817, %v816
          %v827 = vpack.c.bf16 %v819, %v818
          %828 = vst [vmem:[#allocation3 + $0x8] sm:$0xff] %v820
          %829 = vst [vmem:[#allocation3 + $0x18] sm:$0xff] %v821
          %830 = vst [vmem:[#allocation3 + $0x28] sm:$0xff] %v822
          %831 = vst [vmem:[#allocation3 + $0x38] sm:$0xff] %v823
          %832 = vst [vmem:[#allocation3 + $0x48] sm:$0xff] %v824
          %833 = vst [vmem:[#allocation3 + $0x58] sm:$0xff] %v825
          %834 = vst [vmem:[#allocation3 + $0x68] sm:$0xff] %v826
          %835 = vst [vmem:[#allocation3 + $0x78] sm:$0xff] %v827
          %v836 = vld [vmem:[#allocation3] sm:$0xff]
          %v837 = vld [vmem:[#allocation3 + $0x8] sm:$0xff]
          %v838 = vld [vmem:[#allocation3 + $0x10] sm:$0xff]
          %v839 = vld [vmem:[#allocation3 + $0x18] sm:$0xff]
          %v840 = vld [vmem:[#allocation3 + $0x20] sm:$0xff]
          %v841 = vld [vmem:[#allocation3 + $0x28] sm:$0xff]
          %v842 = vld [vmem:[#allocation3 + $0x30] sm:$0xff]
          %v843 = vld [vmem:[#allocation3 + $0x38] sm:$0xff]
          %v844 = vld [vmem:[#allocation3 + $0x40] sm:$0xff]
          %v845 = vld [vmem:[#allocation3 + $0x48] sm:$0xff]
          %v846 = vld [vmem:[#allocation3 + $0x50] sm:$0xff]
          %v847 = vld [vmem:[#allocation3 + $0x58] sm:$0xff]
          %v848 = vld [vmem:[#allocation3 + $0x60] sm:$0xff]
          %v849 = vld [vmem:[#allocation3 + $0x68] sm:$0xff]
          %v850 = vld [vmem:[#allocation3 + $0x70] sm:$0xff]
          %v851 = vld [vmem:[#allocation3 + $0x78] sm:$0xff]
          %v852 = vld [vmem:[#allocation10] sm:$0xf]
          %v853 = vld [vmem:[#allocation10 + $0x4] sm:$0xf]
          %v854 = vld [vmem:[#allocation10 + $0x8] sm:$0xf]
          %v855 = vld [vmem:[#allocation10 + $0xc] sm:$0xf]
          %v856 = vld [vmem:[#allocation10 + $0x10] sm:$0xf]
          %v857 = vld [vmem:[#allocation10 + $0x14] sm:$0xf]
          %v858 = vld [vmem:[#allocation10 + $0x18] sm:$0xf]
          %v859 = vld [vmem:[#allocation10 + $0x1c] sm:$0xf]
          %v860 = vld [vmem:[#allocation10 + $0x20] sm:$0xf]
          %v861 = vld [vmem:[#allocation10 + $0x24] sm:$0xf]
          %v862 = vld [vmem:[#allocation10 + $0x28] sm:$0xf]
          %v863 = vld [vmem:[#allocation10 + $0x2c] sm:$0xf]
          %v864 = vld [vmem:[#allocation10 + $0x30] sm:$0xf]
          %v865 = vld [vmem:[#allocation10 + $0x34] sm:$0xf]
          %v866 = vld [vmem:[#allocation10 + $0x38] sm:$0xf]
          %v867 = vld [vmem:[#allocation10 + $0x3c] sm:$0xf]
          %v868 = vld [vmem:[#allocation10 + $0x40] sm:$0xf]
          %v869 = vld [vmem:[#allocation10 + $0x44] sm:$0xf]
          %v870 = vld [vmem:[#allocation10 + $0x48] sm:$0xf]
          %v871 = vld [vmem:[#allocation10 + $0x4c] sm:$0xf]
          %v872 = vld [vmem:[#allocation10 + $0x50] sm:$0xf]
          %v873 = vld [vmem:[#allocation10 + $0x54] sm:$0xf]
          %v874 = vld [vmem:[#allocation10 + $0x58] sm:$0xf]
          %v875 = vld [vmem:[#allocation10 + $0x5c] sm:$0xf]
          %v876 = vld [vmem:[#allocation10 + $0x60] sm:$0xf]
          %v877 = vld [vmem:[#allocation10 + $0x64] sm:$0xf]
          %v878 = vld [vmem:[#allocation10 + $0x68] sm:$0xf]
          %v879 = vld [vmem:[#allocation10 + $0x6c] sm:$0xf]
          %v880 = vld [vmem:[#allocation10 + $0x70] sm:$0xf]
          %v881 = vld [vmem:[#allocation10 + $0x74] sm:$0xf]
          %v882 = vld [vmem:[#allocation10 + $0x78] sm:$0xf]
          %v883 = vld [vmem:[#allocation10 + $0x7c] sm:$0xf]
          %v884 = vld [vmem:[%s4] sm:$0x1]
          %v886 = vlaneseq
          %v887 = vshrl.u32 %v886, 7
          %v888 = vsub.s32 0, %v887
          %v889 = vrot.slane %v884, %v888
          %v923 = vunpack.c.l.b16 %v852
          %v924 = vunpack.c.l.b16 %v853
          %v925 = vunpack.c.l.b16 %v854
          %v926 = vunpack.c.l.b16 %v855
          %v927 = vunpack.c.l.b16 %v856
          %v928 = vunpack.c.l.b16 %v857
          %v929 = vunpack.c.l.b16 %v858
          %v930 = vunpack.c.l.b16 %v859
          %v931 = vunpack.c.l.b16 %v860
          %v932 = vunpack.c.l.b16 %v861
          %v933 = vunpack.c.l.b16 %v862
          %v934 = vunpack.c.l.b16 %v863
          %v935 = vunpack.c.l.b16 %v864
          %v936 = vunpack.c.l.b16 %v865
          %v937 = vunpack.c.l.b16 %v866
          %v938 = vunpack.c.l.b16 %v867
          %v939 = vunpack.c.l.b16 %v868
          %v940 = vunpack.c.l.b16 %v869
          %v941 = vunpack.c.l.b16 %v870
          %v942 = vunpack.c.l.b16 %v871
          %v943 = vunpack.c.l.b16 %v872
          %v944 = vunpack.c.l.b16 %v873
          %v945 = vunpack.c.l.b16 %v874
          %v946 = vunpack.c.l.b16 %v875
          %v947 = vunpack.c.l.b16 %v876
          %v948 = vunpack.c.l.b16 %v877
          %v949 = vunpack.c.l.b16 %v878
          %v950 = vunpack.c.l.b16 %v879
          %v951 = vunpack.c.l.b16 %v880
          %v952 = vunpack.c.l.b16 %v881
          %v953 = vunpack.c.l.b16 %v882
          %v954 = vunpack.c.l.b16 %v883
          %v955 = vpack.c.b16 %v924, %v923
          %v956 = vpack.c.b16 %v926, %v925
          %v957 = vpack.c.b16 %v928, %v927
          %v958 = vpack.c.b16 %v930, %v929
          %v959 = vpack.c.b16 %v932, %v931
          %v960 = vpack.c.b16 %v934, %v933
          %v961 = vpack.c.b16 %v936, %v935
          %v962 = vpack.c.b16 %v938, %v937
          %v963 = vpack.c.b16 %v940, %v939
          %v964 = vpack.c.b16 %v942, %v941
          %v965 = vpack.c.b16 %v944, %v943
          %v966 = vpack.c.b16 %v946, %v945
          %v967 = vpack.c.b16 %v948, %v947
          %v968 = vpack.c.b16 %v950, %v949
          %v969 = vpack.c.b16 %v952, %v951
          %v970 = vpack.c.b16 %v954, %v953
          %987 = vmatprep.subr.bf16.mxu0 0
          %988 = vmatpush1.bf16.msra.mxu0 %v955
          %989 = vmatprep.subr.bf16.mxu0 0
          %990 = vmatpush1.bf16.msra.mxu0 %v956
          %991 = vmatprep.subr.bf16.mxu0 0
          %992 = vmatpush1.bf16.msra.mxu0 %v957
          %993 = vmatprep.subr.bf16.mxu0 0
          %994 = vmatpush1.bf16.msra.mxu0 %v958
          %995 = vmatprep.subr.bf16.mxu0 0
          %996 = vmatpush1.bf16.msra.mxu0 %v959
          %997 = vmatprep.subr.bf16.mxu0 0
          %998 = vmatpush1.bf16.msra.mxu0 %v960
          %999 = vmatprep.subr.bf16.mxu0 0
          %1000 = vmatpush1.bf16.msra.mxu0 %v961
          %1001 = vmatprep.subr.bf16.mxu0 0
          %1002 = vmatpush1.bf16.msra.mxu0 %v962
          %1003 = vmatprep.subr.bf16.mxu0 0
          %1004 = vmatpush1.bf16.msra.mxu0 %v963
          %1005 = vmatprep.subr.bf16.mxu0 0
          %1006 = vmatpush1.bf16.msra.mxu0 %v964
          %1007 = vmatprep.subr.bf16.mxu0 0
          %1008 = vmatpush1.bf16.msra.mxu0 %v965
          %1009 = vmatprep.subr.bf16.mxu0 0
          %1010 = vmatpush1.bf16.msra.mxu0 %v966
          %1011 = vmatprep.subr.bf16.mxu0 0
          %1012 = vmatpush1.bf16.msra.mxu0 %v967
          %1013 = vmatprep.subr.bf16.mxu0 0
          %1014 = vmatpush1.bf16.msra.mxu0 %v968
          %1015 = vmatprep.subr.bf16.mxu0 0
          %1016 = vmatpush1.bf16.msra.mxu0 %v969
          %1017 = vmatprep.subr.bf16.mxu0 0
          %1018 = vmatpush1.bf16.msra.mxu0 %v970
          %1019 = vmatprep.mubr.bf16.mxu0 %v837
          %1020 = vmatmul.mubr.bf16.gmra.mrb[0].mxu0 %v836
          %v1021 = vpop.f32.mrb[0].mxu0
          %v1022 = vadd.f32 %v889, %v1021
          %v1023 = vpop.f32.mrb[0].mxu0
          %v1024 = vpop.f32.mrb[0].mxu0
          %v1025 = vadd.f32 %v889, %v1024
          %v1026 = vpop.f32.mrb[0].mxu0
          %1027 = vmatprep.mubr.bf16.mxu0 %v839
          %1028 = vmatmul.mubr.bf16.gmra.mrb[0].mxu0 %v838
          %v1029 = vpop.f32.mrb[0].mxu0
          %v1030 = vadd.f32 %v889, %v1029
          %v1031 = vpop.f32.mrb[0].mxu0
          %v1032 = vpop.f32.mrb[0].mxu0
          %v1033 = vadd.f32 %v889, %v1032
          %v1034 = vpop.f32.mrb[0].mxu0
          %1035 = vmatprep.mubr.bf16.mxu0 %v841
          %1036 = vmatmul.mubr.bf16.gmra.mrb[0].mxu0 %v840
          %v1037 = vpop.f32.mrb[0].mxu0
          %v1038 = vadd.f32 %v889, %v1037
          %v1039 = vpop.f32.mrb[0].mxu0
          %v1040 = vpop.f32.mrb[0].mxu0
          %v1041 = vadd.f32 %v889, %v1040
          %v1042 = vpop.f32.mrb[0].mxu0
          %1043 = vmatprep.mubr.bf16.mxu0 %v843
          %1044 = vmatmul.mubr.bf16.gmra.mrb[0].mxu0 %v842
          %v1045 = vpop.f32.mrb[0].mxu0
          %v1046 = vadd.f32 %v889, %v1045
          %v1047 = vpop.f32.mrb[0].mxu0
          %v1048 = vpop.f32.mrb[0].mxu0
          %v1049 = vadd.f32 %v889, %v1048
          %v1050 = vpop.f32.mrb[0].mxu0
          %1051 = vmatprep.mubr.bf16.mxu0 %v845
          %1052 = vmatmul.mubr.bf16.gmra.mrb[0].mxu0 %v844
          %v1053 = vpop.f32.mrb[0].mxu0
          %v1054 = vadd.f32 %v889, %v1053
          %v1055 = vpop.f32.mrb[0].mxu0
          %v1056 = vpop.f32.mrb[0].mxu0
          %v1057 = vadd.f32 %v889, %v1056
          %v1058 = vpop.f32.mrb[0].mxu0
          %1059 = vmatprep.mubr.bf16.mxu0 %v847
          %1060 = vmatmul.mubr.bf16.gmra.mrb[0].mxu0 %v846
          %v1061 = vpop.f32.mrb[0].mxu0
          %v1062 = vadd.f32 %v889, %v1061
          %v1063 = vpop.f32.mrb[0].mxu0
          %v1064 = vpop.f32.mrb[0].mxu0
          %v1065 = vadd.f32 %v889, %v1064
          %v1066 = vpop.f32.mrb[0].mxu0
          %1067 = vmatprep.mubr.bf16.mxu0 %v849
          %1068 = vmatmul.mubr.bf16.gmra.mrb[0].mxu0 %v848
          %v1069 = vpop.f32.mrb[0].mxu0
          %v1070 = vadd.f32 %v889, %v1069
          %v1071 = vpop.f32.mrb[0].mxu0
          %v1072 = vpop.f32.mrb[0].mxu0
          %v1073 = vadd.f32 %v889, %v1072
          %v1074 = vpop.f32.mrb[0].mxu0
          %1075 = vmatprep.mubr.bf16.mxu0 %v851
          %1076 = vmatmul.mubr.bf16.gmra.mrb[0].mxu0 %v850
          %v1077 = vpop.f32.mrb[0].mxu0
          %v1078 = vadd.f32 %v889, %v1077
          %v1079 = vpop.f32.mrb[0].mxu0
          %v1080 = vpop.f32.mrb[0].mxu0
          %v1081 = vadd.f32 %v889, %v1080
          %v1082 = vpop.f32.mrb[0].mxu0
          %1083 = vdwg.mxu0
          %v1084 = vmax.f32 %v1022, 0.0
          %v1085 = vmax.f32 %v1025, 0.0
          %v1086 = vmax.f32 %v1030, 0.0
          %v1087 = vmax.f32 %v1033, 0.0
          %v1088 = vmax.f32 %v1038, 0.0
          %v1089 = vmax.f32 %v1041, 0.0
          %v1090 = vmax.f32 %v1046, 0.0
          %v1091 = vmax.f32 %v1049, 0.0
          %v1092 = vmax.f32 %v1054, 0.0
          %v1093 = vmax.f32 %v1057, 0.0
          %v1094 = vmax.f32 %v1062, 0.0
          %v1095 = vmax.f32 %v1065, 0.0
          %v1096 = vmax.f32 %v1070, 0.0
          %v1097 = vmax.f32 %v1073, 0.0
          %v1098 = vmax.f32 %v1078, 0.0
          %v1099 = vmax.f32 %v1081, 0.0
          %v1100 = vpack.c.bf16 %v1085, %v1084
          %v1101 = vpack.c.bf16 %v1087, %v1086
          %v1102 = vpack.c.bf16 %v1089, %v1088
          %v1103 = vpack.c.bf16 %v1091, %v1090
          %v1104 = vpack.c.bf16 %v1093, %v1092
          %v1105 = vpack.c.bf16 %v1095, %v1094
          %v1106 = vpack.c.bf16 %v1097, %v1096
          %v1107 = vpack.c.bf16 %v1099, %v1098
          %v1116 = vunpack.c.l.b16 %v1100
          %v1117 = vunpack.c.h.b16 %v1100
          %v1118 = vunpack.c.l.b16 %v1101
          %v1119 = vunpack.c.h.b16 %v1101
          %v1120 = vunpack.c.l.b16 %v1102
          %v1121 = vunpack.c.h.b16 %v1102
          %v1122 = vunpack.c.l.b16 %v1103
          %v1123 = vunpack.c.h.b16 %v1103
          %v1124 = vunpack.c.l.b16 %v1104
          %v1125 = vunpack.c.h.b16 %v1104
          %v1126 = vunpack.c.l.b16 %v1105
          %v1127 = vunpack.c.h.b16 %v1105
          %v1128 = vunpack.c.l.b16 %v1106
          %v1129 = vunpack.c.h.b16 %v1106
          %v1130 = vunpack.c.l.b16 %v1107
          %v1131 = vunpack.c.h.b16 %v1107
          %v1132 = vpack.c.b16 %v1116, %v1116
          %v1133 = vpack.c.b16 %v1117, %v1117
          %v1134 = vpack.c.b16 %v1118, %v1118
          %v1135 = vpack.c.b16 %v1119, %v1119
          %v1136 = vpack.c.b16 %v1120, %v1120
          %v1137 = vpack.c.b16 %v1121, %v1121
          %v1138 = vpack.c.b16 %v1122, %v1122
          %v1139 = vpack.c.b16 %v1123, %v1123
          %v1140 = vpack.c.b16 %v1124, %v1124
          %v1141 = vpack.c.b16 %v1125, %v1125
          %v1142 = vpack.c.b16 %v1126, %v1126
          %v1143 = vpack.c.b16 %v1127, %v1127
          %v1144 = vpack.c.b16 %v1128, %v1128
          %v1145 = vpack.c.b16 %v1129, %v1129
          %v1146 = vpack.c.b16 %v1130, %v1130
          %v1147 = vpack.c.b16 %v1131, %v1131
          %1164 = vst [vmem:[%s333] sm:$0xf] %v1132
          %1165 = vst [vmem:[%s333 + $0x4] sm:$0xf] %v1133
          %1166 = vst [vmem:[%s333 + $0x8] sm:$0xf] %v1134
          %1167 = vst [vmem:[%s333 + $0xc] sm:$0xf] %v1135
          %1168 = vst [vmem:[%s333 + $0x10] sm:$0xf] %v1136
          %1169 = vst [vmem:[%s333 + $0x14] sm:$0xf] %v1137
          %1170 = vst [vmem:[%s333 + $0x18] sm:$0xf] %v1138
          %1171 = vst [vmem:[%s333 + $0x1c] sm:$0xf] %v1139
          %1172 = vst [vmem:[%s333 + $0x20] sm:$0xf] %v1140
          %1173 = vst [vmem:[%s333 + $0x24] sm:$0xf] %v1141
          %1174 = vst [vmem:[%s333 + $0x28] sm:$0xf] %v1142
          %1175 = vst [vmem:[%s333 + $0x2c] sm:$0xf] %v1143
          %1176 = vst [vmem:[%s333 + $0x30] sm:$0xf] %v1144
          %1177 = vst [vmem:[%s333 + $0x34] sm:$0xf] %v1145
          %1178 = vst [vmem:[%s333 + $0x38] sm:$0xf] %v1146
          %1179 = vst [vmem:[%s333 + $0x3c] sm:$0xf] %v1147
        $region64: #{tpu_custom_call.1} parent=39 // pred_fallthru
          _
        %s1180 = sand.u32 %s165, 1
        %s1181 = scalar_lea.sflag [#allocation6], %s1180
        %s1182 = sand.u32 %s165, 1
        %s1183 = smul.addr %s1182, 64
        %s1184 = scalar_lea.vmem [#allocation11], %s1183
        // Predicated region
        $region65: #{tpu_custom_call.1} parent=39 // pred_check
          %p1185 = pneg %p175
        $region66: #{tpu_custom_call.1} parent=39 // pred_check_branch
          %1187 = sbr.rel (%p1185) target = $region68
        $region67: #{tpu_custom_call.1} parent=39 // pred_region
          %s1188 = smul.u32 16, %s27
          %s1190 = ssub.s32 1024, 1024
          %1191 = vsyncadd %s1181, %s1190
          %s1192 = smul.addr %s1188, 64
          %s1193 = scalar_lea.hbm %s5, %s1192
          %s1194 = sshll.u32 %s1184, 4
          %s1195 = int_to_ptr.vmem [resolvable:$true] %s1194
          %1200 = dma.vmem_to_hbm [thread:$0]  %s1195, 1024, %s1193, %s1181, 64, 64, 4
        $region68: #{tpu_custom_call.1} parent=39 // pred_fallthru
          _
      $region40: #{tpu_custom_call.1} parent=5 // pred_fallthru
        _
      %p1201 = scmp.le.s32.totalorder 2, %s18
      // Predicated region
      $region69: #{tpu_custom_call.1} parent=5 // pred_check
        %p1202 = pneg %p1201
      $region70: #{tpu_custom_call.1} parent=5 // pred_check_branch
        %1204 = sbr.rel (%p1202) target = $region72
      $region71: #{tpu_custom_call.1} parent=5 // pred_region
        %s1205 = ssub.s32 %s18, 2
        // Predicated region
        $region73: #{tpu_custom_call.1} parent=71 // pred_check
          %p1206 = pneg %p181
        $region74: #{tpu_custom_call.1} parent=71 // pred_check_branch
          %1208 = sbr.rel (%p1206) target = $region76
        $region75: #{tpu_custom_call.1} parent=71 // pred_region
          %s1209 = sand.u32 %s166, 1
          %s1210 = scalar_lea.sflag [#allocation6], %s1209
          %s1211 = sand.u32 %s166, 1
          %s1212 = smul.addr %s1211, 64
          %s1213 = scalar_lea.vmem [#allocation11], %s1212
          %1214 = dma.done %s1210, 1024
        $region76: #{tpu_custom_call.1} parent=71 // pred_fallthru
          _
      $region72: #{tpu_custom_call.1} parent=5 // pred_fallthru
        _
    $region6: #{tpu_custom_call.1} parent=1 // loop_footer
      %s22 = sadd.s32 1, %s18
    $region7: #{tpu_custom_call.1} parent=1 // loop_footer_branch
      %17 = sbr.rel target = $region3
    $region8: #{tpu_custom_call.1} parent=1 // loop_exit
      _
    %1215 = vsyncpa [#allocation5], 1
    %s1216 = scalar_lea.sflag [#allocation5], 1
    %1217 = vsyncpa %s1216, 1
    %1218 = vsyncpa [#allocation8], 1
    %1219 = vsyncpa [#allocation6], 1
    %s1220 = scalar_lea.sflag [#allocation6], 1
    %1221 = vsyncpa %s1220, 1

</llo_original>
